<compile_context>
chip_gen: v5e
topology: v5e:2x2
jax: 0.10.0
libtpu: 0.0.40
codegen_flags: <defaults>
</compile_context>

<pallas_src>
import jax
import jax.numpy as jnp
import numpy as np
from jax.experimental import pallas as pl
from jax.experimental.pallas import tpu as pltpu


def _round_up(x, m):
    return ((x + m - 1) // m) * m


def _pick_b_tile(b_padded, max_tile=128):
    bb = min(b_padded, max_tile)
    while b_padded % bb != 0 or bb % 8 != 0:
        bb -= 8
    return bb


def _pick_t_tile(t, max_tile):
    if t <= max_tile:
        return t
    for d in range(min(max_tile, t) // 8 * 8, 7, -8):
        if t % d == 0:
            return d
    # No multiple-of-8 divisor <= max_tile; fall back to the full T extent.
    # TODO(synk): ragged T tiles would need an in-kernel T mask.
    return t


def _pad_to(x, shape):
    pads = [(0, s - d) for d, s in zip(x.shape, shape)]
    if any(p for _, p in pads):
        x = jnp.pad(x, pads)
    return x


def lg_attention_kernel(enc_y_ref, c_hid_ref, emb_ref, w_emb_ref, w_ct_ref,
                        b_ref, out_ref, m_sc, l_sc, acc_sc):
    j = pl.program_id(1)

    @pl.when(j == 0)
    def _init():
        m_sc[...] = jnp.full_like(m_sc, -jnp.inf)
        l_sc[...] = jnp.zeros_like(l_sc)
        acc_sc[...] = jnp.zeros_like(acc_sc)

    enc_y = enc_y_ref[...]                                   # (bb, bt, Hp)
    at = enc_y * c_hid_ref[...][:, None, :]                  # (bb, bt, Hp)

    # Online softmax over the T (sublane) axis.
    m_prev = m_sc[...]                                       # (bb, Hp)
    m_new = jnp.maximum(m_prev, jnp.max(at, axis=1))         # (bb, Hp)
    alpha = jnp.exp(m_prev - m_new)                          # rescale old sums
    e = jnp.exp(at - m_new[:, None, :])                      # (bb, bt, Hp)

    l_sc[...] = alpha * l_sc[...] + jnp.sum(e, axis=1)
    acc_sc[...] = alpha * acc_sc[...] + jnp.sum(e * enc_y, axis=1)
    m_sc[...] = m_new

    @pl.when(j == pl.num_programs(1) - 1)
    def _finalize():
        # Divide hoisted out of the T loop: one reciprocal per (b, h).
        ct = acc_sc[...] * pl.reciprocal(l_sc[...], approx=False)
        # Linear(2H -> H) without the lane-axis concat: two accumulating
        # matmuls against the two halves of the torch weight, contracting on
        # the input-feature axis (axis 1 of both operands -> no transpose).
        dn = (((1,), (1,)), ((), ()))
        y = jax.lax.dot_general(emb_ref[...], w_emb_ref[...], dn,
                                preferred_element_type=jnp.float32)
        y = y + jax.lax.dot_general(ct, w_ct_ref[...], dn,
                                    preferred_element_type=jnp.float32)
        y = y + b_ref[...]
        out_ref[...] = jnp.maximum(y, 0.0).astype(out_ref.dtype)


def lg_attention(enc_y, c_hid, embeded, weight, bias, *, max_t_tile=None):
    """weight: (H, 2H) torch nn.Linear layout, bias: (H,)."""
    B, T, H = enc_y.shape
    Hp = _round_up(H, 128)          # lane-dense hidden dim
    Bp = _round_up(B, 8)            # sublane-dense batch dim

    # Parameter prep (ideally hoisted to parameter-init time): split the
    # Linear weight into its `embeded` and `ct` halves; no transpose needed.
    w_emb = _pad_to(weight[:, :H], (Hp, Hp))
    w_ct = _pad_to(weight[:, H:], (Hp, Hp))
    b2d = _pad_to(bias.reshape(1, H), (1, Hp))

    enc_y_p = _pad_to(enc_y, (Bp, T, Hp))
    c_hid_p = _pad_to(c_hid, (Bp, Hp))
    emb_p = _pad_to(embeded, (Bp, Hp))

    bb = _pick_b_tile(Bp)
    # Keep each enc_y tile <= ~4 MiB so 2x double-buffering fits comfortably
    # on v7x (64 MiB physical VMEM) as well as v5e/v6e.
    budget_bt = max(8, ((4 << 20) // (bb * Hp * 4)) // 8 * 8)
    if max_t_tile is not None:
        budget_bt = min(budget_bt, max_t_tile)
    bt = _pick_t_tile(T, budget_bt)

    grid = (Bp // bb, T // bt)

    vmem_need = 4 * (2 * bb * bt * Hp        # enc_y (double-buffered)
                     + 2 * 2 * bb * Hp       # c_hid + embeded
                     + 2 * 2 * Hp * Hp       # weight halves
                     + 2 * Hp                # bias
                     + 2 * bb * Hp           # output block
                     + 3 * bb * Hp)          # online-softmax scratch
    vmem_limit = int(min(max(2 * vmem_need, 4 << 20), 32 << 20))

    cost = pl.CostEstimate(
        flops=int(2 * Bp * (2 * Hp) * Hp + 6 * Bp * T * Hp),
        transcendentals=int(Bp * T * Hp + 2 * Bp * Hp),
        bytes_accessed=int(4 * (Bp * T * Hp + 2 * Bp * Hp + 2 * Hp * Hp
                                + Hp + Bp * Hp)),
    )

    out_p = pl.pallas_call(
        lg_attention_kernel,
        out_shape=jax.ShapeDtypeStruct((Bp, Hp), jnp.float32),
        grid_spec=pltpu.PrefetchScalarGridSpec(
            num_scalar_prefetch=0,
            grid=grid,
            in_specs=[
                pl.BlockSpec((bb, bt, Hp), lambda i, j: (i, j, 0)),  # enc_y
                pl.BlockSpec((bb, Hp), lambda i, j: (i, 0)),         # c_hid
                pl.BlockSpec((bb, Hp), lambda i, j: (i, 0)),         # embeded
                pl.BlockSpec((Hp, Hp), lambda i, j: (0, 0)),         # W[:, :H]
                pl.BlockSpec((Hp, Hp), lambda i, j: (0, 0)),         # W[:, H:]
                pl.BlockSpec((1, Hp), lambda i, j: (0, 0)),          # bias
            ],
            out_specs=pl.BlockSpec((bb, Hp), lambda i, j: (i, 0)),
            scratch_shapes=[pltpu.VMEM((bb, Hp), jnp.float32)] * 3,
        ),
        compiler_params=pltpu.CompilerParams(
            dimension_semantics=("parallel", "arbitrary"),
            vmem_limit_bytes=vmem_limit,
        ),
        cost_estimate=cost,
    )(enc_y_p, c_hid_p, emb_p, w_emb, w_ct, b2d)

    return out_p[:B, :H]


def lg_attention_ref(enc_y, c_hid, embeded, weight, bias):
    """Pure-JAX reference mirroring the PyTorch forward."""
    at = enc_y * c_hid[:, None, :]
    a_hat = jax.nn.softmax(at, axis=1)
    ct = jnp.sum(a_hat * enc_y, axis=1)
    cat = jnp.concatenate([embeded, ct], axis=1)
    y = cat @ weight.T + bias
    return jnp.maximum(y, 0.0)


def _run_case(B, T, H, key, **kwargs):
    k1, k2, k3, k4, k5 = jax.random.split(key, 5)
    enc_y = jax.random.normal(k1, (B, T, H), dtype=jnp.float32)
    c_hid = jax.random.normal(k2, (B, H), dtype=jnp.float32)
    embeded = jax.random.normal(k3, (B, H), dtype=jnp.float32)

    # nn.Linear(2H, H) parameters, deterministic init (uniform +-1/sqrt(2H))
    bound = 1.0 / np.sqrt(2 * H)
    weight = jax.random.uniform(k4, (H, 2 * H), dtype=jnp.float32,
                                minval=-bound, maxval=bound)
    bias = jax.random.uniform(k5, (H,), dtype=jnp.float32,
                              minval=-bound, maxval=bound)

    out = jax.block_until_ready(
        lg_attention(enc_y, c_hid, embeded, weight, bias, **kwargs))
    ref = lg_attention_ref(enc_y, c_hid, embeded, weight, bias)
    np.testing.assert_allclose(np.asarray(out), np.asarray(ref),
                               rtol=1e-5, atol=1e-5)


if __name__ == "__main__":
    root = jax.random.PRNGKey(0)
    k_a, k_b = jax.random.split(root)
    # Shapes implied by the module's forward: batch=2, seq(T)=8, hidden(H)=32.
    _run_case(2, 8, 32, k_a)
    # Exercise the multi-step online-softmax path (tiled T, padded batch).
    _run_case(3, 48, 32, k_b, max_t_tile=16)
    print("KERNEL_OK")
</pallas_src>

<mosaic_0001>
module attributes {stable_mosaic.version = 11 : i64} {
  func.func @lg_attention_kernel(%arg0: i32, %arg1: i32, %arg2: memref<8x8x128xf32, #tpu.memory_space<vmem>>, %arg3: memref<8x128xf32, #tpu.memory_space<vmem>>, %arg4: memref<8x128xf32, #tpu.memory_space<vmem>>, %arg5: memref<128x128xf32, #tpu.memory_space<vmem>>, %arg6: memref<128x128xf32, #tpu.memory_space<vmem>>, %arg7: memref<1x128xf32, #tpu.memory_space<vmem>>, %arg8: memref<8x128xf32, #tpu.memory_space<vmem>>, %arg9: memref<8x128xf32, #tpu.memory_space<vmem>>, %arg10: memref<8x128xf32, #tpu.memory_space<vmem>>, %arg11: memref<8x128xf32, #tpu.memory_space<vmem>>) attributes {dimension_semantics = [#tpu.dimension_semantics<parallel>, #tpu.dimension_semantics<arbitrary>], iteration_bounds = array<i64: 1, 1>, scalar_prefetch = 0 : i64, scratch_operands = 3 : i64, tpu.core_type = #tpu.core_type<tc>, window_params = [{transform_indices = @transform_0, window_bounds = array<i64: 8, 8, 128>}, {transform_indices = @transform_1, window_bounds = array<i64: 8, 128>}, {transform_indices = @transform_2, window_bounds = array<i64: 8, 128>}, {pipeline_mode = #tpu.pipeline_mode<synchronous>, transform_indices = @transform_3, window_bounds = array<i64: 128, 128>}, {pipeline_mode = #tpu.pipeline_mode<synchronous>, transform_indices = @transform_4, window_bounds = array<i64: 128, 128>}, {pipeline_mode = #tpu.pipeline_mode<synchronous>, transform_indices = @transform_5, window_bounds = array<i64: 1, 128>}, {transform_indices = @transform_6, window_bounds = array<i64: 8, 128>}]} {
    %c0_i32 = arith.constant 0 : i32
    %0 = arith.cmpi eq, %arg1, %c0_i32 : i32
    %1 = arith.extui %0 : i1 to i32
    %c0_i32_0 = arith.constant 0 : i32
    %2 = arith.cmpi ne, %1, %c0_i32_0 : i32
    scf.if %2 {
      %cst_21 = arith.constant 0xFF800000 : f32
      %32 = vector.broadcast %cst_21 : f32 to vector<8x128xf32>
      %c0_22 = arith.constant 0 : index
      %c0_23 = arith.constant 0 : index
      %33 = vector.load %arg9[%c0_22, %c0_23] : memref<8x128xf32, #tpu.memory_space<vmem>>, vector<8x128xf32>
      tpu.vector_store %arg9[%c0_22, %c0_23], %32 {strides = array<i32>} : memref<8x128xf32, #tpu.memory_space<vmem>>, vector<8x128xf32>,
      %cst_24 = arith.constant 0.000000e+00 : f32
      %34 = vector.broadcast %cst_24 : f32 to vector<8x128xf32>
      %c0_25 = arith.constant 0 : index
      %c0_26 = arith.constant 0 : index
      %35 = vector.load %arg10[%c0_25, %c0_26] : memref<8x128xf32, #tpu.memory_space<vmem>>, vector<8x128xf32>
      tpu.vector_store %arg10[%c0_25, %c0_26], %34 {strides = array<i32>} : memref<8x128xf32, #tpu.memory_space<vmem>>, vector<8x128xf32>,
      %cst_27 = arith.constant 0.000000e+00 : f32
      %36 = vector.broadcast %cst_27 : f32 to vector<8x128xf32>
      %c0_28 = arith.constant 0 : index
      %c0_29 = arith.constant 0 : index
      %37 = vector.load %arg11[%c0_28, %c0_29] : memref<8x128xf32, #tpu.memory_space<vmem>>, vector<8x128xf32>
      tpu.vector_store %arg11[%c0_28, %c0_29], %36 {strides = array<i32>} : memref<8x128xf32, #tpu.memory_space<vmem>>, vector<8x128xf32>,
    } else {
    }
    %c0 = arith.constant 0 : index
    %c0_1 = arith.constant 0 : index
    %c0_2 = arith.constant 0 : index
    %3 = vector.load %arg2[%c0, %c0_1, %c0_2] : memref<8x8x128xf32, #tpu.memory_space<vmem>>, vector<8x8x128xf32>
    %c0_3 = arith.constant 0 : index
    %c0_4 = arith.constant 0 : index
    %4 = vector.load %arg3[%c0_3, %c0_4] : memref<8x128xf32, #tpu.memory_space<vmem>>, vector<8x128xf32>
    %5 = vector.shape_cast %4 : vector<8x128xf32> to vector<8x1x128xf32>
    %6 = vector.broadcast %5 : vector<8x1x128xf32> to vector<8x8x128xf32>
    %7 = arith.mulf %3, %6 : vector<8x8x128xf32>
    %c0_5 = arith.constant 0 : index
    %c0_6 = arith.constant 0 : index
    %8 = vector.load %arg9[%c0_5, %c0_6] : memref<8x128xf32, #tpu.memory_space<vmem>>, vector<8x128xf32>
    %cst = arith.constant dense<0xFF800000> : vector<8x128xf32>
    %9 = vector.multi_reduction <maximumf>, %7, %cst [1] : vector<8x8x128xf32> to vector<8x128xf32>
    %10 = arith.maximumf %8, %9 : vector<8x128xf32>
    %11 = arith.subf %8, %10 : vector<8x128xf32>
    %12 = math.exp %11 : vector<8x128xf32>
    %13 = vector.shape_cast %10 : vector<8x128xf32> to vector<8x1x128xf32>
    %14 = vector.broadcast %13 : vector<8x1x128xf32> to vector<8x8x128xf32>
    %15 = arith.subf %7, %14 : vector<8x8x128xf32>
    %16 = math.exp %15 : vector<8x8x128xf32>
    %c0_7 = arith.constant 0 : index
    %c0_8 = arith.constant 0 : index
    %17 = vector.load %arg10[%c0_7, %c0_8] : memref<8x128xf32, #tpu.memory_space<vmem>>, vector<8x128xf32>
    %18 = arith.mulf %12, %17 : vector<8x128xf32>
    %cst_9 = arith.constant dense<0.000000e+00> : vector<8x128xf32>
    %19 = vector.multi_reduction <add>, %16, %cst_9 [1] : vector<8x8x128xf32> to vector<8x128xf32>
    %20 = arith.addf %18, %19 : vector<8x128xf32>
    %c0_10 = arith.constant 0 : index
    %c0_11 = arith.constant 0 : index
    %21 = vector.load %arg10[%c0_10, %c0_11] : memref<8x128xf32, #tpu.memory_space<vmem>>, vector<8x128xf32>
    tpu.vector_store %arg10[%c0_10, %c0_11], %20 {strides = array<i32>} : memref<8x128xf32, #tpu.memory_space<vmem>>, vector<8x128xf32>,
    %c0_12 = arith.constant 0 : index
    %c0_13 = arith.constant 0 : index
    %22 = vector.load %arg11[%c0_12, %c0_13] : memref<8x128xf32, #tpu.memory_space<vmem>>, vector<8x128xf32>
    %23 = arith.mulf %12, %22 : vector<8x128xf32>
    %24 = arith.mulf %16, %3 : vector<8x8x128xf32>
    %cst_14 = arith.constant dense<0.000000e+00> : vector<8x128xf32>
    %25 = vector.multi_reduction <add>, %24, %cst_14 [1] : vector<8x8x128xf32> to vector<8x128xf32>
    %26 = arith.addf %23, %25 : vector<8x128xf32>
    %c0_15 = arith.constant 0 : index
    %c0_16 = arith.constant 0 : index
    %27 = vector.load %arg11[%c0_15, %c0_16] : memref<8x128xf32, #tpu.memory_space<vmem>>, vector<8x128xf32>
    tpu.vector_store %arg11[%c0_15, %c0_16], %26 {strides = array<i32>} : memref<8x128xf32, #tpu.memory_space<vmem>>, vector<8x128xf32>,
    %c0_17 = arith.constant 0 : index
    %c0_18 = arith.constant 0 : index
    %28 = vector.load %arg9[%c0_17, %c0_18] : memref<8x128xf32, #tpu.memory_space<vmem>>, vector<8x128xf32>
    tpu.vector_store %arg9[%c0_17, %c0_18], %10 {strides = array<i32>} : memref<8x128xf32, #tpu.memory_space<vmem>>, vector<8x128xf32>,
    %c0_i32_19 = arith.constant 0 : i32
    %29 = arith.cmpi eq, %arg1, %c0_i32_19 : i32
    %30 = arith.extui %29 : i1 to i32
    %c0_i32_20 = arith.constant 0 : i32
    %31 = arith.cmpi ne, %30, %c0_i32_20 : i32
    scf.if %31 {
      %c0_21 = arith.constant 0 : index
      %c0_22 = arith.constant 0 : index
      %32 = vector.load %arg11[%c0_21, %c0_22] : memref<8x128xf32, #tpu.memory_space<vmem>>, vector<8x128xf32>
      %c0_23 = arith.constant 0 : index
      %c0_24 = arith.constant 0 : index
      %33 = vector.load %arg10[%c0_23, %c0_24] : memref<8x128xf32, #tpu.memory_space<vmem>>, vector<8x128xf32>
      %34 = tpu.reciprocal %33 : vector<8x128xf32> -> vector<8x128xf32>
      %35 = arith.mulf %32, %34 : vector<8x128xf32>
      %c0_25 = arith.constant 0 : index
      %c0_26 = arith.constant 0 : index
      %36 = vector.load %arg4[%c0_25, %c0_26] : memref<8x128xf32, #tpu.memory_space<vmem>>, vector<8x128xf32>
      %c0_27 = arith.constant 0 : index
      %c0_28 = arith.constant 0 : index
      %37 = vector.load %arg5[%c0_27, %c0_28] : memref<128x128xf32, #tpu.memory_space<vmem>>, vector<128x128xf32>
      %cst_29 = arith.constant dense<0.000000e+00> : vector<8x128xf32>
      %38 = tpu.matmul %36, %37, %cst_29 {dimension_numbers = #tpu.dot_dimension_numbers<[1], [1], [0], [0], [0, 0, 1, 0], [], []>} : vector<8x128xf32>, vector<128x128xf32>, vector<8x128xf32> -> vector<8x128xf32>
      %c0_30 = arith.constant 0 : index
      %c0_31 = arith.constant 0 : index
      %39 = vector.load %arg6[%c0_30, %c0_31] : memref<128x128xf32, #tpu.memory_space<vmem>>, vector<128x128xf32>
      %cst_32 = arith.constant dense<0.000000e+00> : vector<8x128xf32>
      %40 = tpu.matmul %35, %39, %cst_32 {dimension_numbers = #tpu.dot_dimension_numbers<[1], [1], [0], [0], [0, 0, 1, 0], [], []>} : vector<8x128xf32>, vector<128x128xf32>, vector<8x128xf32> -> vector<8x128xf32>
      %41 = arith.addf %38, %40 : vector<8x128xf32>
      %c0_33 = arith.constant 0 : index
      %c0_34 = arith.constant 0 : index
      %42 = vector.load %arg7[%c0_33, %c0_34] : memref<1x128xf32, #tpu.memory_space<vmem>>, vector<1x128xf32>
      %43 = vector.broadcast %42 : vector<1x128xf32> to vector<8x128xf32>
      %44 = arith.addf %41, %43 : vector<8x128xf32>
      %cst_35 = arith.constant 0.000000e+00 : f32
      %45 = vector.broadcast %cst_35 : f32 to vector<8x128xf32>
      %46 = arith.maximumf %44, %45 : vector<8x128xf32>
      %c0_36 = arith.constant 0 : index
      %c0_37 = arith.constant 0 : index
      %47 = vector.load %arg8[%c0_36, %c0_37] : memref<8x128xf32, #tpu.memory_space<vmem>>, vector<8x128xf32>
      tpu.vector_store %arg8[%c0_36, %c0_37], %46 {strides = array<i32>} : memref<8x128xf32, #tpu.memory_space<vmem>>, vector<8x128xf32>,
    } else {
    }
    return
  }
  func.func @transform_0(%arg0: i32, %arg1: i32) -> (i32, i32, i32) {
    %c0_i32 = arith.constant 0 : i32
    %c0_i32_0 = arith.constant 0 : i32
    return %arg0, %arg1, %c0_i32 : i32, i32, i32
  }
  func.func @transform_1(%arg0: i32, %arg1: i32) -> (i32, i32) {
    %c0_i32 = arith.constant 0 : i32
    %c0_i32_0 = arith.constant 0 : i32
    return %arg0, %c0_i32 : i32, i32
  }
  func.func @transform_2(%arg0: i32, %arg1: i32) -> (i32, i32) {
    %c0_i32 = arith.constant 0 : i32
    %c0_i32_0 = arith.constant 0 : i32
    return %arg0, %c0_i32 : i32, i32
  }
  func.func @transform_3(%arg0: i32, %arg1: i32) -> (i32, i32) {
    %c0_i32 = arith.constant 0 : i32
    %c0_i32_0 = arith.constant 0 : i32
    %c0_i32_1 = arith.constant 0 : i32
    return %c0_i32, %c0_i32_0 : i32, i32
  }
  func.func @transform_4(%arg0: i32, %arg1: i32) -> (i32, i32) {
    %c0_i32 = arith.constant 0 : i32
    %c0_i32_0 = arith.constant 0 : i32
    %c0_i32_1 = arith.constant 0 : i32
    return %c0_i32, %c0_i32_0 : i32, i32
  }
  func.func @transform_5(%arg0: i32, %arg1: i32) -> (i32, i32) {
    %c0_i32 = arith.constant 0 : i32
    %c0_i32_0 = arith.constant 0 : i32
    %c0_i32_1 = arith.constant 0 : i32
    return %c0_i32, %c0_i32_0 : i32, i32
  }
  func.func @transform_6(%arg0: i32, %arg1: i32) -> (i32, i32) {
    %c0_i32 = arith.constant 0 : i32
    %c0_i32_0 = arith.constant 0 : i32
    return %arg0, %c0_i32 : i32, i32
  }
}

</mosaic_0001>

<llo_original>
// kernel: tpu_custom_call.1
$region0: #{tpu_custom_call.1}
  #allocation0 [shape = 'u32[]', space=smem, size = 0x4, offset = 0x4, fixed_abs, tag = 'smem constant byte address 0x4 - core index']
  #allocation1 [shape = 'u32[72,128]{1,0:T(1,128)}', space=vmem, size = 0x9000, scoped, tag = 'internal scratch']
  #allocation2 [shape = 'f32[8,128]{1,0:T(8,128)}', space=vmem, size = 0x1000, scoped, tag = 'scratch operand']
  #allocation3 [shape = 'f32[8,128]{1,0:T(8,128)}', space=vmem, size = 0x1000, scoped, tag = 'scratch operand']
  #allocation4 [shape = 'f32[8,128]{1,0:T(8,128)}', space=vmem, size = 0x1000, scoped, tag = 'scratch operand']
  %s0 = inlined_call_operand.hbm [shape: f32[8,8,128], index: 0, kind: input, shape index: {}]
  %s1 = inlined_call_operand.hbm [shape: f32[8,128], index: 1, kind: input, shape index: {}]
  %s2 = inlined_call_operand.hbm [shape: f32[8,128], index: 2, kind: input, shape index: {}]
  %s3 = inlined_call_operand.hbm [shape: f32[128,128], index: 3, kind: input, shape index: {}]
  %s4 = inlined_call_operand.hbm [shape: f32[128,128], index: 4, kind: input, shape index: {}]
  %s5 = inlined_call_operand.vmem [shape: f32[1,128], index: 5, kind: input, shape index: {}]
  %s6 = inlined_call_operand.hbm [shape: f32[8,128], index: 6, kind: output, shape index: {}]
  %s7 = sld [smem:[#allocation0]]
  $region62: #{tpu_custom_call.1} parent=0
    _
  %s9 = ssub.s32 1, %s7
  %s10 = scalar_select 0, %s9, %s7
  $region1: #{tpu_custom_call.1} parent=0
    #allocation5 [shape = 'u8[32768]{0}', space=vmem, size = 0x8000, scoped, tag = 'input window, operand 0, single buffered']
    #allocation6 [shape = 's32[1]{0}', space=sflag, size = 0x4, scoped, tag = 'scoped memory for tpu_custom_call.1']
    #allocation7 [shape = 's32[1]{0}', space=sflag, size = 0x4, scoped, tag = 'scoped memory for tpu_custom_call.1']
    #allocation8 [shape = 'u8[4096]{0}', space=vmem, size = 0x1000, scoped, tag = 'input window, operand 1, single buffered']
    #allocation9 [shape = 's32[1]{0}', space=sflag, size = 0x4, scoped, tag = 'scoped memory for tpu_custom_call.1']
    #allocation10 [shape = 'u8[4096]{0}', space=vmem, size = 0x1000, scoped, tag = 'input window, operand 2, single buffered']
    #allocation11 [shape = 'u8[65536]{0}', space=vmem, size = 0x10000, scoped, tag = 'input window, operand 3, single buffered']
    #allocation12 [shape = 's32[1]{0}', space=sflag, size = 0x4, scoped, tag = 'scoped memory for tpu_custom_call.1']
    #allocation13 [shape = 'u8[65536]{0}', space=vmem, size = 0x10000, scoped, tag = 'input window, operand 4, single buffered']
    #allocation14 [shape = 'u8[4096]{0}', space=vmem, size = 0x1000, scoped, tag = 'output window, operand 0, single buffered']
    %11 = vsyncpa [#allocation6], 0
    %12 = vsyncpa [#allocation9], 0
    %13 = vsyncpa [#allocation12], 0
    %14 = vsyncpa [#allocation7], 0
    // Predicated region
    $region2: #{tpu_custom_call.1} parent=1 // pred_check
      _
    $region3: #{tpu_custom_call.1} parent=1 // pred_check_branch
      %16 = sbr.rel (0) target = $region5
    $region4: #{tpu_custom_call.1} parent=1 // pred_region
      %18 = vsyncadd [#allocation6], 0
      %s19 = sshll.u32 %s0, 4
      %s20 = int_to_ptr.hbm [resolvable:$true] %s19
      %s21 = sshll.u32 [#allocation5], 4
      %s22 = int_to_ptr.vmem [resolvable:$true] %s21
      %27 = dma.hbm_to_vmem [thread:$0]  %s20, 1024, %s22, [#allocation6], 128, 128, 8
    $region5: #{tpu_custom_call.1} parent=1 // pred_fallthru
      _
    // Predicated region
    $region6: #{tpu_custom_call.1} parent=1 // pred_check
      _
    $region7: #{tpu_custom_call.1} parent=1 // pred_check_branch
      %29 = sbr.rel (0) target = $region9
    $region8: #{tpu_custom_call.1} parent=1 // pred_region
      %31 = vsyncadd [#allocation9], 0
      %s33 = sshll.u32 %s1, 4
      %s34 = int_to_ptr.hbm [resolvable:$true] %s33
      %s35 = sshll.u32 [#allocation8], 4
      %s36 = int_to_ptr.vmem [resolvable:$true] %s35
      %38 = dma.hbm_to_vmem [thread:$0]  %s34, 128, %s36, [#allocation9]
    $region9: #{tpu_custom_call.1} parent=1 // pred_fallthru
      _
    // Predicated region
    $region10: #{tpu_custom_call.1} parent=1 // pred_check
      _
    $region11: #{tpu_custom_call.1} parent=1 // pred_check_branch
      %40 = sbr.rel (0) target = $region13
    $region12: #{tpu_custom_call.1} parent=1 // pred_region
      %42 = vsyncadd [#allocation9], 0
      %s44 = sshll.u32 %s2, 4
      %s45 = int_to_ptr.hbm [resolvable:$true] %s44
      %s46 = sshll.u32 [#allocation10], 4
      %s47 = int_to_ptr.vmem [resolvable:$true] %s46
      %49 = dma.hbm_to_vmem [thread:$0]  %s45, 128, %s47, [#allocation9]
    $region13: #{tpu_custom_call.1} parent=1 // pred_fallthru
      _
    // Predicated region
    $region14: #{tpu_custom_call.1} parent=1 // pred_check
      _
    $region15: #{tpu_custom_call.1} parent=1 // pred_check_branch
      %51 = sbr.rel (0) target = $region17
    $region16: #{tpu_custom_call.1} parent=1 // pred_region
      %53 = vsyncadd [#allocation12], 0
      %s54 = sshll.u32 %s3, 4
      %s55 = int_to_ptr.hbm [resolvable:$true] %s54
      %s56 = sshll.u32 [#allocation11], 4
      %s57 = int_to_ptr.vmem [resolvable:$true] %s56
      %62 = dma.hbm_to_vmem [thread:$0]  %s55, 2048, %s57, [#allocation12], 128, 128, 8
    $region17: #{tpu_custom_call.1} parent=1 // pred_fallthru
      _
    // Predicated region
    $region18: #{tpu_custom_call.1} parent=1 // pred_check
      _
    $region19: #{tpu_custom_call.1} parent=1 // pred_check_branch
      %64 = sbr.rel (0) target = $region21
    $region20: #{tpu_custom_call.1} parent=1 // pred_region
      %66 = vsyncadd [#allocation12], 0
      %s67 = sshll.u32 %s4, 4
      %s68 = int_to_ptr.hbm [resolvable:$true] %s67
      %s69 = sshll.u32 [#allocation13], 4
      %s70 = int_to_ptr.vmem [resolvable:$true] %s69
      %75 = dma.hbm_to_vmem [thread:$0]  %s68, 2048, %s70, [#allocation12], 128, 128, 8
    $region21: #{tpu_custom_call.1} parent=1 // pred_fallthru
      _
    // Predicated region
    $region22: #{tpu_custom_call.1} parent=1 // pred_check
      _
    $region23: #{tpu_custom_call.1} parent=1 // pred_check_branch
      %77 = sbr.rel (0) target = $region25
    $region24: #{tpu_custom_call.1} parent=1 // pred_region
      _
    $region25: #{tpu_custom_call.1} parent=1 // pred_fallthru
      _
    // Predicated region
    $region26: #{tpu_custom_call.1} parent=1 // pred_check
      _
    $region27: #{tpu_custom_call.1} parent=1 // pred_check_branch
      %79 = sbr.rel (0) target = $region29
    $region28: #{tpu_custom_call.1} parent=1 // pred_region
      %81 = dma.done [#allocation6], 1024
    $region29: #{tpu_custom_call.1} parent=1 // pred_fallthru
      _
    // Predicated region
    $region30: #{tpu_custom_call.1} parent=1 // pred_check
      _
    $region31: #{tpu_custom_call.1} parent=1 // pred_check_branch
      %83 = sbr.rel (0) target = $region33
    $region32: #{tpu_custom_call.1} parent=1 // pred_region
      %85 = dma.done [#allocation9], 128
    $region33: #{tpu_custom_call.1} parent=1 // pred_fallthru
      _
    // Predicated region
    $region34: #{tpu_custom_call.1} parent=1 // pred_check
      _
    $region35: #{tpu_custom_call.1} parent=1 // pred_check_branch
      %87 = sbr.rel (0) target = $region37
    $region36: #{tpu_custom_call.1} parent=1 // pred_region
      %89 = dma.done [#allocation9], 128
    $region37: #{tpu_custom_call.1} parent=1 // pred_fallthru
      _
    // Predicated region
    $region38: #{tpu_custom_call.1} parent=1 // pred_check
      _
    $region39: #{tpu_custom_call.1} parent=1 // pred_check_branch
      %91 = sbr.rel (0) target = $region41
    $region40: #{tpu_custom_call.1} parent=1 // pred_region
      %93 = dma.done [#allocation12], 2048
    $region41: #{tpu_custom_call.1} parent=1 // pred_fallthru
      _
    // Predicated region
    $region42: #{tpu_custom_call.1} parent=1 // pred_check
      _
    $region43: #{tpu_custom_call.1} parent=1 // pred_check_branch
      %95 = sbr.rel (0) target = $region45
    $region44: #{tpu_custom_call.1} parent=1 // pred_region
      %97 = dma.done [#allocation12], 2048
    $region45: #{tpu_custom_call.1} parent=1 // pred_fallthru
      _
    %p98 = scmp.eq.s32.totalorder 0, 0
    // Predicated region
    $region46: #{tpu_custom_call.1} parent=1 // pred_check
      %p99 = pneg %p98
    $region47: #{tpu_custom_call.1} parent=1 // pred_check_branch
      %101 = sbr.rel (%p99) target = $region49
    $region48: #{tpu_custom_call.1} parent=1 // pred_region
      %102 = vst [vmem:[#allocation2] sm:$0xff] -inf
      %103 = vst [vmem:[#allocation3] sm:$0xff] 0.0
      %104 = vst [vmem:[#allocation4] sm:$0xff] 0.0
    $region49: #{tpu_custom_call.1} parent=1 // pred_fallthru
      _
    %v105 = vld [vmem:[#allocation5] sm:$0xff]
    %v106 = vld [vmem:[#allocation5 + $0x8] sm:$0xff]
    %v107 = vld [vmem:[#allocation5 + $0x10] sm:$0xff]
    %v108 = vld [vmem:[#allocation5 + $0x18] sm:$0xff]
    %v109 = vld [vmem:[#allocation5 + $0x20] sm:$0xff]
    %v110 = vld [vmem:[#allocation5 + $0x28] sm:$0xff]
    %v111 = vld [vmem:[#allocation5 + $0x30] sm:$0xff]
    %v112 = vld [vmem:[#allocation5 + $0x38] sm:$0xff]
    %v113 = vld [vmem:[#allocation8] sm:$0xff]
    %v115 = vrot.slane %v113, 1
    %v116 = vrot.slane %v113, 2
    %v117 = vrot.slane %v113, 3
    %v118 = vrot.slane %v113, 4
    %v119 = vrot.slane %v113, 5
    %v120 = vrot.slane %v113, 6
    %v121 = vrot.slane %v113, 7
    %v122 = vperm.slane %v113, 0
    %v123 = vperm.slane %v115, 0
    %v124 = vperm.slane %v116, 0
    %v125 = vperm.slane %v117, 0
    %v126 = vperm.slane %v118, 0
    %v127 = vperm.slane %v119, 0
    %v128 = vperm.slane %v120, 0
    %v129 = vperm.slane %v121, 0
    %v138 = vmul.f32 %v105, %v122
    %v139 = vmul.f32 %v106, %v123
    %v140 = vmul.f32 %v107, %v124
    %v141 = vmul.f32 %v108, %v125
    %v142 = vmul.f32 %v109, %v126
    %v143 = vmul.f32 %v110, %v127
    %v144 = vmul.f32 %v111, %v128
    %v145 = vmul.f32 %v112, %v129
    %v146 = vld [vmem:[#allocation2] sm:$0xff]
    %v147 = vrot.slane %v138, 4
    %v148 = vmax.f32 %v138, %v147
    %v149 = vrot.slane %v148, 2
    %v150 = vmax.f32 %v148, %v149
    %v151 = vrot.slane %v150, 1
    %v152 = vmax.f32 %v150, %v151
    %v153 = vrot.slane %v139, 4
    %v154 = vmax.f32 %v139, %v153
    %v155 = vrot.slane %v154, 2
    %v156 = vmax.f32 %v154, %v155
    %v157 = vrot.slane %v156, 1
    %v158 = vmax.f32 %v156, %v157
    %v159 = vrot.slane %v140, 4
    %v160 = vmax.f32 %v140, %v159
    %v161 = vrot.slane %v160, 2
    %v162 = vmax.f32 %v160, %v161
    %v163 = vrot.slane %v162, 1
    %v164 = vmax.f32 %v162, %v163
    %v165 = vrot.slane %v141, 4
    %v166 = vmax.f32 %v141, %v165
    %v167 = vrot.slane %v166, 2
    %v168 = vmax.f32 %v166, %v167
    %v169 = vrot.slane %v168, 1
    %v170 = vmax.f32 %v168, %v169
    %v171 = vrot.slane %v142, 4
    %v172 = vmax.f32 %v142, %v171
    %v173 = vrot.slane %v172, 2
    %v174 = vmax.f32 %v172, %v173
    %v175 = vrot.slane %v174, 1
    %v176 = vmax.f32 %v174, %v175
    %v177 = vrot.slane %v143, 4
    %v178 = vmax.f32 %v143, %v177
    %v179 = vrot.slane %v178, 2
    %v180 = vmax.f32 %v178, %v179
    %v181 = vrot.slane %v180, 1
    %v182 = vmax.f32 %v180, %v181
    %v183 = vrot.slane %v144, 4
    %v184 = vmax.f32 %v144, %v183
    %v185 = vrot.slane %v184, 2
    %v186 = vmax.f32 %v184, %v185
    %v187 = vrot.slane %v186, 1
    %v188 = vmax.f32 %v186, %v187
    %v189 = vrot.slane %v145, 4
    %v190 = vmax.f32 %v145, %v189
    %v191 = vrot.slane %v190, 2
    %v192 = vmax.f32 %v190, %v191
    %v193 = vrot.slane %v192, 1
    %v194 = vmax.f32 %v192, %v193
    %vm203 = vcmask 1041409
    %v204 = vsel %vm203, %v158, %v152
    %vm205 = vcmask 1042434
    %v206 = vsel %vm205, %v164, %v204
    %vm207 = vcmask 1043459
    %v208 = vsel %vm207, %v170, %v206
    %vm209 = vcmask 1044484
    %v210 = vsel %vm209, %v176, %v208
    %vm211 = vcmask 1045509
    %v212 = vsel %vm211, %v182, %v210
    %vm213 = vcmask 1046534
    %v214 = vsel %vm213, %v188, %v212
    %vm215 = vcmask 1047559
    %v216 = vsel %vm215, %v194, %v214
    %v218 = vmax.f32 %v146, %v216
    %v219 = vsub.f32 %v146, %v218
    %v220 = vmul.f32 %v219, 1.442695
    %v221 = vpow.pop %v220
    %v223 = vrot.slane %v218, 1
    %v224 = vrot.slane %v218, 2
    %v225 = vrot.slane %v218, 3
    %v226 = vrot.slane %v218, 4
    %v227 = vrot.slane %v218, 5
    %v228 = vrot.slane %v218, 6
    %v229 = vrot.slane %v218, 7
    %v230 = vperm.slane %v218, 0
    %v231 = vperm.slane %v223, 0
    %v232 = vperm.slane %v224, 0
    %v233 = vperm.slane %v225, 0
    %v234 = vperm.slane %v226, 0
    %v235 = vperm.slane %v227, 0
    %v236 = vperm.slane %v228, 0
    %v237 = vperm.slane %v229, 0
    %v246 = vsub.f32 %v138, %v230
    %v247 = vsub.f32 %v139, %v231
    %v248 = vsub.f32 %v140, %v232
    %v249 = vsub.f32 %v141, %v233
    %v250 = vsub.f32 %v142, %v234
    %v251 = vsub.f32 %v143, %v235
    %v252 = vsub.f32 %v144, %v236
    %v253 = vsub.f32 %v145, %v237
    %v254 = vmul.f32 %v246, 1.442695
    %v255 = vpow.pop %v254
    %v256 = vmul.f32 %v247, 1.442695
    %v257 = vpow.pop %v256
    %v258 = vmul.f32 %v248, 1.442695
    %v259 = vpow.pop %v258
    %v260 = vmul.f32 %v249, 1.442695
    %v261 = vpow.pop %v260
    %v262 = vmul.f32 %v250, 1.442695
    %v263 = vpow.pop %v262
    %v264 = vmul.f32 %v251, 1.442695
    %v265 = vpow.pop %v264
    %v266 = vmul.f32 %v252, 1.442695
    %v267 = vpow.pop %v266
    %v268 = vmul.f32 %v253, 1.442695
    %v269 = vpow.pop %v268
    %v270 = vld [vmem:[#allocation3] sm:$0xff]
    %v271 = vmul.f32 %v221, %v270
    %v272 = vrot.slane %v255, 4
    %v273 = vadd.f32 %v255, %v272
    %v274 = vrot.slane %v273, 2
    %v275 = vadd.f32 %v273, %v274
    %v276 = vrot.slane %v275, 1
    %v277 = vadd.f32 %v275, %v276
    %v278 = vrot.slane %v257, 4
    %v279 = vadd.f32 %v257, %v278
    %v280 = vrot.slane %v279, 2
    %v281 = vadd.f32 %v279, %v280
    %v282 = vrot.slane %v281, 1
    %v283 = vadd.f32 %v281, %v282
    %v284 = vrot.slane %v259, 4
    %v285 = vadd.f32 %v259, %v284
    %v286 = vrot.slane %v285, 2
    %v287 = vadd.f32 %v285, %v286
    %v288 = vrot.slane %v287, 1
    %v289 = vadd.f32 %v287, %v288
    %v290 = vrot.slane %v261, 4
    %v291 = vadd.f32 %v261, %v290
    %v292 = vrot.slane %v291, 2
    %v293 = vadd.f32 %v291, %v292
    %v294 = vrot.slane %v293, 1
    %v295 = vadd.f32 %v293, %v294
    %v296 = vrot.slane %v263, 4
    %v297 = vadd.f32 %v263, %v296
    %v298 = vrot.slane %v297, 2
    %v299 = vadd.f32 %v297, %v298
    %v300 = vrot.slane %v299, 1
    %v301 = vadd.f32 %v299, %v300
    %v302 = vrot.slane %v265, 4
    %v303 = vadd.f32 %v265, %v302
    %v304 = vrot.slane %v303, 2
    %v305 = vadd.f32 %v303, %v304
    %v306 = vrot.slane %v305, 1
    %v307 = vadd.f32 %v305, %v306
    %v308 = vrot.slane %v267, 4
    %v309 = vadd.f32 %v267, %v308
    %v310 = vrot.slane %v309, 2
    %v311 = vadd.f32 %v309, %v310
    %v312 = vrot.slane %v311, 1
    %v313 = vadd.f32 %v311, %v312
    %v314 = vrot.slane %v269, 4
    %v315 = vadd.f32 %v269, %v314
    %v316 = vrot.slane %v315, 2
    %v317 = vadd.f32 %v315, %v316
    %v318 = vrot.slane %v317, 1
    %v319 = vadd.f32 %v317, %v318
    %v328 = vsel %vm203, %v283, %v277
    %v329 = vsel %vm205, %v289, %v328
    %v330 = vsel %vm207, %v295, %v329
    %v331 = vsel %vm209, %v301, %v330
    %v332 = vsel %vm211, %v307, %v331
    %v333 = vsel %vm213, %v313, %v332
    %v334 = vsel %vm215, %v319, %v333
    %v336 = vadd.f32 %v271, %v334
    %337 = vst [vmem:[#allocation3] sm:$0xff] %v336
    %v338 = vld [vmem:[#allocation4] sm:$0xff]
    %v339 = vmul.f32 %v221, %v338
    %v340 = vmul.f32 %v255, %v105
    %v341 = vmul.f32 %v257, %v106
    %v342 = vmul.f32 %v259, %v107
    %v343 = vmul.f32 %v261, %v108
    %v344 = vmul.f32 %v263, %v109
    %v345 = vmul.f32 %v265, %v110
    %v346 = vmul.f32 %v267, %v111
    %v347 = vmul.f32 %v269, %v112
    %v348 = vrot.slane %v340, 4
    %v349 = vadd.f32 %v340, %v348
    %v350 = vrot.slane %v349, 2
    %v351 = vadd.f32 %v349, %v350
    %v352 = vrot.slane %v351, 1
    %v353 = vadd.f32 %v351, %v352
    %v354 = vrot.slane %v341, 4
    %v355 = vadd.f32 %v341, %v354
    %v356 = vrot.slane %v355, 2
    %v357 = vadd.f32 %v355, %v356
    %v358 = vrot.slane %v357, 1
    %v359 = vadd.f32 %v357, %v358
    %v360 = vrot.slane %v342, 4
    %v361 = vadd.f32 %v342, %v360
    %v362 = vrot.slane %v361, 2
    %v363 = vadd.f32 %v361, %v362
    %v364 = vrot.slane %v363, 1
    %v365 = vadd.f32 %v363, %v364
    %v366 = vrot.slane %v343, 4
    %v367 = vadd.f32 %v343, %v366
    %v368 = vrot.slane %v367, 2
    %v369 = vadd.f32 %v367, %v368
    %v370 = vrot.slane %v369, 1
    %v371 = vadd.f32 %v369, %v370
    %v372 = vrot.slane %v344, 4
    %v373 = vadd.f32 %v344, %v372
    %v374 = vrot.slane %v373, 2
    %v375 = vadd.f32 %v373, %v374
    %v376 = vrot.slane %v375, 1
    %v377 = vadd.f32 %v375, %v376
    %v378 = vrot.slane %v345, 4
    %v379 = vadd.f32 %v345, %v378
    %v380 = vrot.slane %v379, 2
    %v381 = vadd.f32 %v379, %v380
    %v382 = vrot.slane %v381, 1
    %v383 = vadd.f32 %v381, %v382
    %v384 = vrot.slane %v346, 4
    %v385 = vadd.f32 %v346, %v384
    %v386 = vrot.slane %v385, 2
    %v387 = vadd.f32 %v385, %v386
    %v388 = vrot.slane %v387, 1
    %v389 = vadd.f32 %v387, %v388
    %v390 = vrot.slane %v347, 4
    %v391 = vadd.f32 %v347, %v390
    %v392 = vrot.slane %v391, 2
    %v393 = vadd.f32 %v391, %v392
    %v394 = vrot.slane %v393, 1
    %v395 = vadd.f32 %v393, %v394
    %v404 = vsel %vm203, %v359, %v353
    %v405 = vsel %vm205, %v365, %v404
    %v406 = vsel %vm207, %v371, %v405
    %v407 = vsel %vm209, %v377, %v406
    %v408 = vsel %vm211, %v383, %v407
    %v409 = vsel %vm213, %v389, %v408
    %v410 = vsel %vm215, %v395, %v409
    %v412 = vadd.f32 %v339, %v410
    %413 = vst [vmem:[#allocation4] sm:$0xff] %v412
    %414 = vst [vmem:[#allocation2] sm:$0xff] %v218
    // Predicated region
    $region50: #{tpu_custom_call.1} parent=1 // pred_check
      %p415 = pneg %p98
    $region51: #{tpu_custom_call.1} parent=1 // pred_check_branch
      %417 = sbr.rel (%p415) target = $region53
    $region52: #{tpu_custom_call.1} parent=1 // pred_region
      %v418 = vld [vmem:[#allocation4] sm:$0xff]
      %v419 = vld [vmem:[#allocation3] sm:$0xff]
      %v420 = vrcp.pop %v419
      %v421 = vmul.f32 %v419, %v420
      %v422 = vsub.f32 1.0, %v421
      %v423 = vmul.f32 %v420, %v422
      %v424 = vadd.f32 %v420, %v423
      %vm425 = vweird.f32 %v419
      %vm426 = vweird.f32 %v420
      %vm427 = vmor %vm425, %vm426
      %v428 = vsel %vm427, %v420, %v424
      %v429 = vand.u32 2147483647, %v419
      %vm430 = vcmp.eq.f32.partialorder %v429, 8.507059e+37
      %v431 = vand.u32 %v419, 2147483648
      %v432 = vor.u32 1.1754944e-38, %v431
      %v433 = vsel %vm430, %v432, %v428
      %v434 = vmul.f32 %v418, %v433
      %v435 = vld [vmem:[#allocation10] sm:$0xff]
      %v436 = vld [vmem:[#allocation11] sm:$0xff]
      %v437 = vld [vmem:[#allocation11 + $0x8] sm:$0xff]
      %v438 = vld [vmem:[#allocation11 + $0x10] sm:$0xff]
      %v439 = vld [vmem:[#allocation11 + $0x18] sm:$0xff]
      %v440 = vld [vmem:[#allocation11 + $0x20] sm:$0xff]
      %v441 = vld [vmem:[#allocation11 + $0x28] sm:$0xff]
      %v442 = vld [vmem:[#allocation11 + $0x30] sm:$0xff]
      %v443 = vld [vmem:[#allocation11 + $0x38] sm:$0xff]
      %v444 = vld [vmem:[#allocation11 + $0x40] sm:$0xff]
      %v445 = vld [vmem:[#allocation11 + $0x48] sm:$0xff]
      %v446 = vld [vmem:[#allocation11 + $0x50] sm:$0xff]
      %v447 = vld [vmem:[#allocation11 + $0x58] sm:$0xff]
      %v448 = vld [vmem:[#allocation11 + $0x60] sm:$0xff]
      %v449 = vld [vmem:[#allocation11 + $0x68] sm:$0xff]
      %v450 = vld [vmem:[#allocation11 + $0x70] sm:$0xff]
      %v451 = vld [vmem:[#allocation11 + $0x78] sm:$0xff]
      %v452 = vld [vmem:[#allocation13] sm:$0xff]
      %v453 = vld [vmem:[#allocation13 + $0x8] sm:$0xff]
      %v454 = vld [vmem:[#allocation13 + $0x10] sm:$0xff]
      %v455 = vld [vmem:[#allocation13 + $0x18] sm:$0xff]
      %v456 = vld [vmem:[#allocation13 + $0x20] sm:$0xff]
      %v457 = vld [vmem:[#allocation13 + $0x28] sm:$0xff]
      %v458 = vld [vmem:[#allocation13 + $0x30] sm:$0xff]
      %v459 = vld [vmem:[#allocation13 + $0x38] sm:$0xff]
      %v460 = vld [vmem:[#allocation13 + $0x40] sm:$0xff]
      %v461 = vld [vmem:[#allocation13 + $0x48] sm:$0xff]
      %v462 = vld [vmem:[#allocation13 + $0x50] sm:$0xff]
      %v463 = vld [vmem:[#allocation13 + $0x58] sm:$0xff]
      %v464 = vld [vmem:[#allocation13 + $0x60] sm:$0xff]
      %v465 = vld [vmem:[#allocation13 + $0x68] sm:$0xff]
      %v466 = vld [vmem:[#allocation13 + $0x70] sm:$0xff]
      %v467 = vld [vmem:[#allocation13 + $0x78] sm:$0xff]
      %468 = vmatpush.xpose.msra.mxu0 %v467
      %469 = vmatpush.xpose.msra.mxu0 %v466
      %470 = vmatpush.xpose.msra.mxu0 %v465
      %471 = vmatpush.xpose.msra.mxu0 %v464
      %472 = vmatpush.xpose.msra.mxu0 %v463
      %473 = vmatpush.xpose.msra.mxu0 %v462
      %474 = vmatpush.xpose.msra.mxu0 %v461
      %475 = vmatpush.xpose.msra.mxu0 %v460
      %476 = vmatpush.xpose.msra.mxu0 %v459
      %477 = vmatpush.xpose.msra.mxu0 %v458
      %478 = vmatpush.xpose.msra.mxu0 %v457
      %479 = vmatpush.xpose.msra.mxu0 %v456
      %480 = vmatpush.xpose.msra.mxu0 %v455
      %481 = vmatpush.xpose.msra.mxu0 %v454
      %482 = vmatpush.xpose.msra.mxu0 %v453
      %483 = vmatpush.xpose.msra.mxu0 %v452
      %484 = vmatmul.f32.gmra.mxu0 %v434
      %v485 = vpop.f32.mrf.mxu0
      %v486 = vadd.f32 0.0, %v485
      %487 = vdwg.mxu0
      %488 = vmatpush.xpose.msra.mxu0 %v451
      %489 = vmatpush.xpose.msra.mxu0 %v450
      %490 = vmatpush.xpose.msra.mxu0 %v449
      %491 = vmatpush.xpose.msra.mxu0 %v448
      %492 = vmatpush.xpose.msra.mxu0 %v447
      %493 = vmatpush.xpose.msra.mxu0 %v446
      %494 = vmatpush.xpose.msra.mxu0 %v445
      %495 = vmatpush.xpose.msra.mxu0 %v444
      %496 = vmatpush.xpose.msra.mxu0 %v443
      %497 = vmatpush.xpose.msra.mxu0 %v442
      %498 = vmatpush.xpose.msra.mxu0 %v441
      %499 = vmatpush.xpose.msra.mxu0 %v440
      %500 = vmatpush.xpose.msra.mxu0 %v439
      %501 = vmatpush.xpose.msra.mxu0 %v438
      %502 = vmatpush.xpose.msra.mxu0 %v437
      %503 = vmatpush.xpose.msra.mxu0 %v436
      %504 = vmatmul.f32.gmra.mxu0 %v435
      %v505 = vpop.f32.mrf.mxu0
      %v506 = vadd.f32 %v486, %v505
      %507 = vdwg.mxu0
      %v508 = vld [vmem:[%s5] sm:$0x1]
      %v510 = vperm.slane %v508, 0
      %v512 = vadd.f32 %v506, %v510
      %v513 = vmax.f32 %v512, 0.0
      %514 = vst [vmem:[#allocation14] sm:$0xff] %v513
    $region53: #{tpu_custom_call.1} parent=1 // pred_fallthru
      _
    // Predicated region
    $region54: #{tpu_custom_call.1} parent=1 // pred_check
      _
    $region55: #{tpu_custom_call.1} parent=1 // pred_check_branch
      %516 = sbr.rel (0) target = $region57
    $region56: #{tpu_custom_call.1} parent=1 // pred_region
      %518 = vsyncadd [#allocation7], 0
      %s520 = sshll.u32 [#allocation14], 4
      %s521 = int_to_ptr.vmem [resolvable:$true] %s520
      %s522 = sshll.u32 %s6, 4
      %s523 = int_to_ptr.hbm [resolvable:$true] %s522
      %525 = dma.vmem_to_hbm [thread:$0]  %s521, 128, %s523, [#allocation7]
    $region57: #{tpu_custom_call.1} parent=1 // pred_fallthru
      _
    // Predicated region
    $region58: #{tpu_custom_call.1} parent=1 // pred_check
      _
    $region59: #{tpu_custom_call.1} parent=1 // pred_check_branch
      %527 = sbr.rel (0) target = $region61
    $region60: #{tpu_custom_call.1} parent=1 // pred_region
      %529 = dma.done [#allocation7], 128
    $region61: #{tpu_custom_call.1} parent=1 // pred_fallthru
      _
    %530 = vsyncpa [#allocation6], 1
    %531 = vsyncpa [#allocation9], 1
    %532 = vsyncpa [#allocation12], 1
    %533 = vsyncpa [#allocation7], 1

</llo_original>
